<compile_context>
chip_gen: v5e
topology: v5e:2x2
jax: 0.10.0
libtpu: 0.0.40
codegen_flags: <defaults>
</compile_context>

<pallas_src>
import math
import functools

import jax
import jax.numpy as jnp
from jax.experimental import pallas as pl
from jax.experimental.pallas import tpu as pltpu


_MXU_DTYPE = jnp.bfloat16   # matmul operand dtype (f32 accumulation via preferred_element_type)
_ACT_DTYPE = jnp.bfloat16   # inter-kernel activation dtype (halves HBM round trips)
_LANE = 128

_PARALLEL1 = pltpu.CompilerParams(dimension_semantics=("parallel",))


def _layernorm_f32(z, gamma, beta, eps):
    """LayerNorm with f32 statistics.  z: (M, H) f32, gamma/beta: (1, H) f32."""
    mu = jnp.mean(z, axis=-1, keepdims=True)
    zc = z - mu
    var = jnp.mean(zc * zc, axis=-1, keepdims=True)
    return zc * jax.lax.rsqrt(var + eps) * gamma + beta


def _gelu(x):
    # TODO(synk): HF BERT default is exact (erf) gelu; tanh approximation used here.
    return jax.nn.gelu(x, approximate=True)


def _row_tile(m, max_tile=256, min_tile=16):
    """Row tile: multiple of min_tile (bf16 sublane packing) dividing m,
    capped at max_tile, preferring >= 2 grid steps for v7x megacore."""
    if m <= min_tile or m % min_tile != 0:
        return m
    cap = max(min_tile, min(max_tile, (m // 2) // min_tile * min_tile))
    t = cap
    while m % t != 0:
        t -= min_tile
    return t


# ----------------------------------------------------------------------------
# Pallas kernels
# ----------------------------------------------------------------------------

def _emb_ln_kernel(x_ref, g_ref, b_ref, o_ref, *, eps):
    z = x_ref[...].astype(jnp.float32)
    o_ref[...] = _layernorm_f32(z, g_ref[...], b_ref[...], eps).astype(o_ref.dtype)


def pallas_embedding_layernorm(x, gamma, beta, eps=1e-12):
    """LayerNorm over the last dim (embedding LN).  x: (M, H) f32 -> (M, H) bf16."""
    M, H = x.shape
    tm = _row_tile(M)
    kernel = functools.partial(_emb_ln_kernel, eps=eps)
    return pl.pallas_call(
        kernel,
        out_shape=jax.ShapeDtypeStruct((M, H), _ACT_DTYPE),
        grid=(M // tm,),
        in_specs=[
            pl.BlockSpec((tm, H), lambda i: (i, 0)),
            pl.BlockSpec((1, H), lambda i: (0, 0)),
            pl.BlockSpec((1, H), lambda i: (0, 0)),
        ],
        out_specs=pl.BlockSpec((tm, H), lambda i: (i, 0)),
        compiler_params=_PARALLEL1,
    )(x, gamma.reshape(1, H), beta.reshape(1, H))


def _attn_layer_kernel(x_ref, qkvw_ref, qkvb_ref, m_ref, ow_ref, ob_ref,
                       g_ref, b_ref, o_ref, *, num_heads, head_dim, scale, eps):
    """One batch element: fused QKV projection, all-head attention, output
    projection, residual add and LayerNorm.  x block: (1, S, H) bf16."""
    H = num_heads * head_dim
    x = x_ref[0]                                              # (S, H) bf16, also the residual
    qkv = jnp.dot(x, qkvw_ref[...],
                  preferred_element_type=jnp.float32) + qkvb_ref[...]   # (S, 3H) f32
    mask = m_ref[0]                                           # (1, S) additive

    # TODO(synk): at production head counts (12) replace the unrolled head loop
    # with a head-batched einsum; at production S (>=512) use a flash-style
    # (q_tile, kv_tile) grid with online-softmax m/l/acc scratch.
    ctx_heads = []
    for h in range(num_heads):                                # static, unrolled
        lo = h * head_dim
        q = qkv[:, lo:lo + head_dim]                          # (S, Dh)
        k = qkv[:, H + lo:H + lo + head_dim]
        v = qkv[:, 2 * H + lo:2 * H + lo + head_dim]
        s = jax.lax.dot_general(
            q.astype(_MXU_DTYPE), k.astype(_MXU_DTYPE),
            (((1,), (1,)), ((), ())),
            preferred_element_type=jnp.float32) * scale + mask          # (S, S)
        s = s - jnp.max(s, axis=-1, keepdims=True)
        p = jnp.exp(s)
        p = p * pl.reciprocal(jnp.sum(p, axis=-1, keepdims=True), approx=True)
        ctx_heads.append(jnp.dot(p.astype(_MXU_DTYPE), v.astype(_MXU_DTYPE),
                                 preferred_element_type=jnp.float32))   # (S, Dh)

    # Assemble all heads in registers -> one lane-dense (S, H) store at the end.
    ctx = jnp.concatenate(ctx_heads, axis=-1)                 # (S, H) f32
    y = jnp.dot(ctx.astype(_MXU_DTYPE), ow_ref[...],
                preferred_element_type=jnp.float32) + ob_ref[...]       # (S, H)
    out = _layernorm_f32(y + x.astype(jnp.float32), g_ref[...], b_ref[...], eps)
    o_ref[0] = out.astype(o_ref.dtype)                        # single unmasked store


def pallas_attention_layer(hidden, add_mask, layer, num_heads, eps=1e-12):
    """hidden: (B, S, H) bf16, add_mask: (B, 1, S) f32 additive.  Returns (B, S, H) bf16."""
    B, S, H = hidden.shape
    head_dim = H // num_heads
    scale = 1.0 / math.sqrt(head_dim)
    kernel = functools.partial(_attn_layer_kernel, num_heads=num_heads,
                               head_dim=head_dim, scale=scale, eps=eps)
    # TODO(synk): constant-index weight blocks could be single-buffered with
    # pipeline_mode=pl.Buffered(1); set vmem_limit_bytes when sized for prod.
    return pl.pallas_call(
        kernel,
        out_shape=jax.ShapeDtypeStruct((B, S, H), _ACT_DTYPE),
        grid=(B,),
        in_specs=[
            pl.BlockSpec((1, S, H), lambda b: (b, 0, 0)),      # hidden (and residual)
            pl.BlockSpec((H, 3 * H), lambda b: (0, 0)),        # fused QKV weight (bf16)
            pl.BlockSpec((1, 3 * H), lambda b: (0, 0)),        # QKV bias
            pl.BlockSpec((1, 1, S), lambda b: (b, 0, 0)),      # additive mask
            pl.BlockSpec((H, H), lambda b: (0, 0)),            # out-proj weight (bf16)
            pl.BlockSpec((1, H), lambda b: (0, 0)),            # out-proj bias
            pl.BlockSpec((1, H), lambda b: (0, 0)),            # LN gamma
            pl.BlockSpec((1, H), lambda b: (0, 0)),            # LN beta
        ],
        out_specs=pl.BlockSpec((1, S, H), lambda b: (b, 0, 0)),
        compiler_params=_PARALLEL1,
    )(hidden, layer["qkv_w"], layer["qkv_b"].reshape(1, 3 * H), add_mask,
      layer["o_w"], layer["o_b"].reshape(1, H),
      layer["attn_ln_g"].reshape(1, H), layer["attn_ln_b"].reshape(1, H))


def _ffn_kernel(x_ref, w1_ref, b1_ref, w2_ref, b2_ref, g_ref, bb_ref, o_ref, *, eps):
    x = x_ref[...]                                            # (tm, H) bf16, also the residual
    h = _gelu(jnp.dot(x, w1_ref[...],
                      preferred_element_type=jnp.float32) + b1_ref[...])
    y = jnp.dot(h.astype(_MXU_DTYPE), w2_ref[...],
                preferred_element_type=jnp.float32) + b2_ref[...]
    out = _layernorm_f32(y + x.astype(jnp.float32), g_ref[...], bb_ref[...], eps)
    o_ref[...] = out.astype(o_ref.dtype)


def pallas_ffn_add_ln(x, w1, b1, w2, b2, gamma, beta, eps=1e-12):
    """LayerNorm(gelu(x@W1+b1)@W2 + b2 + x) in one kernel, row-tiled over M.
    The residual is x itself, so no separate residual operand is DMA'd."""
    M, H = x.shape
    I = w1.shape[1]
    tm = _row_tile(M)
    kernel = functools.partial(_ffn_kernel, eps=eps)
    # TODO(synk): at production H=768/I=3072 tile the I/K axes with an f32
    # accumulator scratch + "arbitrary" reduction grid axis, single-buffer the
    # constant-index weight blocks (pl.Buffered(1)) and set vmem_limit_bytes.
    return pl.pallas_call(
        kernel,
        out_shape=jax.ShapeDtypeStruct((M, H), _ACT_DTYPE),
        grid=(M // tm,),
        in_specs=[
            pl.BlockSpec((tm, H), lambda i: (i, 0)),
            pl.BlockSpec((H, I), lambda i: (0, 0)),
            pl.BlockSpec((1, I), lambda i: (0, 0)),
            pl.BlockSpec((I, H), lambda i: (0, 0)),
            pl.BlockSpec((1, H), lambda i: (0, 0)),
            pl.BlockSpec((1, H), lambda i: (0, 0)),
            pl.BlockSpec((1, H), lambda i: (0, 0)),
        ],
        out_specs=pl.BlockSpec((tm, H), lambda i: (i, 0)),
        compiler_params=_PARALLEL1,
    )(x, w1, b1.reshape(1, I), w2, b2.reshape(1, H),
      gamma.reshape(1, H), beta.reshape(1, H))


def _pool_fc_kernel(x_ref, pw_ref, pb_ref, fw_ref, fb_ref, o_ref):
    pooled = jnp.tanh(jnp.dot(x_ref[...], pw_ref[...],
                              preferred_element_type=jnp.float32) + pb_ref[...])
    o_ref[...] = jnp.dot(pooled.astype(_MXU_DTYPE), fw_ref[...],
                         preferred_element_type=jnp.float32) + fb_ref[...]


def pallas_pooler_classifier(cls_tok, pool_w, pool_b, fc_w_pad, fc_b_pad):
    """tanh(cls @ pool_w + pool_b) @ fc_w + fc_b in one kernel.
    fc weights are padded to a 128-wide lane dim so the store is unmasked;
    the caller slices the logits back to num_classes."""
    B, H = cls_tok.shape
    Cp = fc_w_pad.shape[1]
    return pl.pallas_call(
        _pool_fc_kernel,
        out_shape=jax.ShapeDtypeStruct((B, Cp), jnp.float32),
    )(cls_tok, pool_w, pool_b.reshape(1, H), fc_w_pad, fc_b_pad.reshape(1, Cp))


# ----------------------------------------------------------------------------
# Model definition (synthetic small BERT + classifier head)
# ----------------------------------------------------------------------------

CFG = dict(
    vocab_size=100,
    type_vocab_size=2,
    max_position=16,
    hidden_size=32,
    num_heads=4,
    intermediate_size=64,
    num_layers=2,
    num_classes=3,
)


def init_params(key, cfg):
    H = cfg["hidden_size"]
    I = cfg["intermediate_size"]
    C = cfg["num_classes"]
    C_pad = ((C + _LANE - 1) // _LANE) * _LANE
    std = 0.02

    def nrm(key, shape):
        return std * jax.random.normal(key, shape, dtype=jnp.float32)

    keys = iter(jax.random.split(key, 128))
    fc_w = nrm(next(keys), (H, C))
    p = {
        "word_emb": nrm(next(keys), (cfg["vocab_size"], H)),
        "pos_emb": nrm(next(keys), (cfg["max_position"], H)),
        "type_emb": nrm(next(keys), (cfg["type_vocab_size"], H)),
        "emb_ln_g": jnp.ones((H,), jnp.float32),
        "emb_ln_b": jnp.zeros((H,), jnp.float32),
        "layers": [],
        # Matmul weights stored in HBM as bf16 (cast once at init, not per step).
        "pool_w": nrm(next(keys), (H, H)).astype(_MXU_DTYPE),
        "pool_b": jnp.zeros((H,), jnp.float32),
        # Classifier weight padded to 128 lanes for an unmasked store.
        "fc_w_pad": jnp.zeros((H, C_pad), jnp.float32).at[:, :C].set(fc_w).astype(_MXU_DTYPE),
        "fc_b_pad": jnp.zeros((C_pad,), jnp.float32),
    }
    for _ in range(cfg["num_layers"]):
        q_w = nrm(next(keys), (H, H))
        k_w = nrm(next(keys), (H, H))
        v_w = nrm(next(keys), (H, H))
        layer = {
            # Q/K/V projections pre-fused into a single (H, 3H) bf16 matmul.
            "qkv_w": jnp.concatenate([q_w, k_w, v_w], axis=1).astype(_MXU_DTYPE),
            "qkv_b": jnp.zeros((3 * H,), jnp.float32),
            "o_w": nrm(next(keys), (H, H)).astype(_MXU_DTYPE),
            "o_b": jnp.zeros((H,), jnp.float32),
            "attn_ln_g": jnp.ones((H,), jnp.float32),
            "attn_ln_b": jnp.zeros((H,), jnp.float32),
            "ffn_w1": nrm(next(keys), (H, I)).astype(_MXU_DTYPE),
            "ffn_b1": jnp.zeros((I,), jnp.float32),
            "ffn_w2": nrm(next(keys), (I, H)).astype(_MXU_DTYPE),
            "ffn_b2": jnp.zeros((H,), jnp.float32),
            "ffn_ln_g": jnp.ones((H,), jnp.float32),
            "ffn_ln_b": jnp.zeros((H,), jnp.float32),
        }
        p["layers"].append(layer)
    return p


def bert_classifier_forward(params, input_ids, segment_ids, attention_mask, cfg):
    B, S = input_ids.shape
    H = cfg["hidden_size"]
    NH = cfg["num_heads"]

    # ---- embeddings (gather glue in plain JAX) ----
    positions = jnp.arange(S, dtype=jnp.int32)
    emb = (jnp.take(params["word_emb"], input_ids, axis=0)
           + jnp.take(params["pos_emb"], positions, axis=0)[None, :, :]
           + jnp.take(params["type_emb"], segment_ids, axis=0))      # (B, S, H) f32

    hidden = pallas_embedding_layernorm(emb.reshape(B * S, H),
                                        params["emb_ln_g"], params["emb_ln_b"])

    # additive attention mask: (B, 1, S)
    add_mask = ((1.0 - attention_mask.astype(jnp.float32)) * -10000.0)[:, None, :]

    for layer in params["layers"]:
        # fused: QKV proj + MHA + out proj + residual + LayerNorm (1 launch)
        hidden = pallas_attention_layer(hidden.reshape(B, S, H), add_mask,
                                        layer, NH).reshape(B * S, H)
        # fused: W1 + gelu + W2 + residual + LayerNorm (1 launch)
        hidden = pallas_ffn_add_ln(hidden, layer["ffn_w1"], layer["ffn_b1"],
                                   layer["ffn_w2"], layer["ffn_b2"],
                                   layer["ffn_ln_g"], layer["ffn_ln_b"])

    # ---- pooler (tanh dense on [CLS]) + classifier fc, fused ----
    cls_tok = hidden.reshape(B, S, H)[:, 0, :]                       # (B, H) bf16
    logits_pad = pallas_pooler_classifier(
        cls_tok, params["pool_w"], params["pool_b"],
        params["fc_w_pad"], params["fc_b_pad"])
    return logits_pad[:, :cfg["num_classes"]]


# ----------------------------------------------------------------------------
# Main
# ----------------------------------------------------------------------------

if __name__ == "__main__":
    B, S = 2, 8
    key = jax.random.PRNGKey(0)
    k_param, k_ids, k_seg = jax.random.split(key, 3)

    params = init_params(k_param, CFG)

    input_ids = jax.random.randint(k_ids, (B, S), 0, CFG["vocab_size"],
                                   dtype=jnp.int32)
    segment_ids = jax.random.randint(k_seg, (B, S), 0, CFG["type_vocab_size"],
                                     dtype=jnp.int32)
    attention_mask = jnp.ones((B, S), dtype=jnp.int32)
    # make it non-trivial: pad out the last two tokens of sequence 1
    attention_mask = attention_mask.at[1, -2:].set(0)

    logits = bert_classifier_forward(params, input_ids, segment_ids,
                                     attention_mask, CFG)
    jax.block_until_ready(logits)

    assert logits.shape == (B, CFG["num_classes"])
    assert logits.dtype == jnp.float32
    print("KERNEL_OK")
</pallas_src>

<mosaic_0001>
module attributes {stable_mosaic.version = 11 : i64} {
  func.func @_emb_ln_kernel(%arg0: i32, %arg1: memref<16x32xf32, #tpu.memory_space<vmem>>, %arg2: memref<1x32xf32, #tpu.memory_space<vmem>>, %arg3: memref<1x32xf32, #tpu.memory_space<vmem>>, %arg4: memref<16x32xbf16, #tpu.memory_space<vmem>>) attributes {dimension_semantics = [#tpu.dimension_semantics<parallel>], iteration_bounds = array<i64: 1>, scalar_prefetch = 0 : i64, scratch_operands = 0 : i64, tpu.core_type = #tpu.core_type<tc>, window_params = [{transform_indices = @transform_0, window_bounds = array<i64: 16, 32>}, {pipeline_mode = #tpu.pipeline_mode<synchronous>, transform_indices = @transform_1, window_bounds = array<i64: 1, 32>}, {pipeline_mode = #tpu.pipeline_mode<synchronous>, transform_indices = @transform_2, window_bounds = array<i64: 1, 32>}, {transform_indices = @transform_3, window_bounds = array<i64: 16, 32>}]} {
    %c0 = arith.constant 0 : index
    %c0_0 = arith.constant 0 : index
    %0 = vector.load %arg1[%c0, %c0_0] : memref<16x32xf32, #tpu.memory_space<vmem>>, vector<16x32xf32>
    %c0_1 = arith.constant 0 : index
    %c0_2 = arith.constant 0 : index
    %1 = vector.load %arg2[%c0_1, %c0_2] : memref<1x32xf32, #tpu.memory_space<vmem>>, vector<1x32xf32>
    %c0_3 = arith.constant 0 : index
    %c0_4 = arith.constant 0 : index
    %2 = vector.load %arg3[%c0_3, %c0_4] : memref<1x32xf32, #tpu.memory_space<vmem>>, vector<1x32xf32>
    %cst = arith.constant dense<0.000000e+00> : vector<16xf32>
    %3 = vector.multi_reduction <add>, %0, %cst [1] : vector<16x32xf32> to vector<16xf32>
    %4 = vector.shape_cast %3 : vector<16xf32> to vector<16x1xf32>
    %cst_5 = arith.constant 3.200000e+01 : f32
    %5 = vector.broadcast %cst_5 : f32 to vector<16x1xf32>
    %6 = arith.divf %4, %5 : vector<16x1xf32>
    %7 = vector.broadcast %6 : vector<16x1xf32> to vector<16x32xf32>
    %8 = arith.subf %0, %7 : vector<16x32xf32>
    %9 = arith.mulf %8, %8 : vector<16x32xf32>
    %cst_6 = arith.constant dense<0.000000e+00> : vector<16xf32>
    %10 = vector.multi_reduction <add>, %9, %cst_6 [1] : vector<16x32xf32> to vector<16xf32>
    %11 = vector.shape_cast %10 : vector<16xf32> to vector<16x1xf32>
    %cst_7 = arith.constant 3.200000e+01 : f32
    %12 = vector.broadcast %cst_7 : f32 to vector<16x1xf32>
    %13 = arith.divf %11, %12 : vector<16x1xf32>
    %cst_8 = arith.constant 9.99999996E-13 : f32
    %14 = vector.broadcast %cst_8 : f32 to vector<16x1xf32>
    %15 = arith.addf %13, %14 : vector<16x1xf32>
    %16 = math.rsqrt %15 : vector<16x1xf32>
    %17 = vector.broadcast %16 : vector<16x1xf32> to vector<16x32xf32>
    %18 = arith.mulf %8, %17 : vector<16x32xf32>
    %19 = vector.broadcast %1 : vector<1x32xf32> to vector<16x32xf32>
    %20 = arith.mulf %18, %19 : vector<16x32xf32>
    %21 = vector.broadcast %2 : vector<1x32xf32> to vector<16x32xf32>
    %22 = arith.addf %20, %21 : vector<16x32xf32>
    %23 = arith.truncf %22 : vector<16x32xf32> to vector<16x32xbf16>
    %c0_9 = arith.constant 0 : index
    %c0_10 = arith.constant 0 : index
    %24 = vector.load %arg4[%c0_9, %c0_10] : memref<16x32xbf16, #tpu.memory_space<vmem>>, vector<16x32xbf16>
    tpu.vector_store %arg4[%c0_9, %c0_10], %23 {strides = array<i32>} : memref<16x32xbf16, #tpu.memory_space<vmem>>, vector<16x32xbf16>,
    return
  }
  func.func @transform_0(%arg0: i32) -> (i32, i32) {
    %c0_i32 = arith.constant 0 : i32
    %c0_i32_0 = arith.constant 0 : i32
    return %arg0, %c0_i32 : i32, i32
  }
  func.func @transform_1(%arg0: i32) -> (i32, i32) {
    %c0_i32 = arith.constant 0 : i32
    %c0_i32_0 = arith.constant 0 : i32
    %c0_i32_1 = arith.constant 0 : i32
    return %c0_i32, %c0_i32_0 : i32, i32
  }
  func.func @transform_2(%arg0: i32) -> (i32, i32) {
    %c0_i32 = arith.constant 0 : i32
    %c0_i32_0 = arith.constant 0 : i32
    %c0_i32_1 = arith.constant 0 : i32
    return %c0_i32, %c0_i32_0 : i32, i32
  }
  func.func @transform_3(%arg0: i32) -> (i32, i32) {
    %c0_i32 = arith.constant 0 : i32
    %c0_i32_0 = arith.constant 0 : i32
    return %arg0, %c0_i32 : i32, i32
  }
}

</mosaic_0001>

<llo_original>
// kernel: tpu_custom_call.1
$region0: #{tpu_custom_call.1}
  #allocation0 [shape = 'u32[]', space=smem, size = 0x4, offset = 0x4, fixed_abs, tag = 'smem constant byte address 0x4 - core index']
  #allocation1 [shape = 'u32[72,128]{1,0:T(1,128)}', space=vmem, size = 0x9000, scoped, tag = 'internal scratch']
  %s0 = inlined_call_operand.hbm [shape: f32[16,32], index: 0, kind: input, shape index: {}]
  %s1 = inlined_call_operand.hbm [shape: f32[1,32], index: 1, kind: input, shape index: {}]
  %s2 = inlined_call_operand.vmem [shape: f32[1,32], index: 2, kind: input, shape index: {}]
  %s3 = inlined_call_operand.hbm [shape: bf16[16,32], index: 3, kind: output, shape index: {}]
  %s4 = sld [smem:[#allocation0]]
  $region30: #{tpu_custom_call.1} parent=0
    _
  %s6 = ssub.s32 1, %s4
  %s7 = scalar_select 0, %s6, %s4
  $region1: #{tpu_custom_call.1} parent=0
    #allocation2 [shape = 'u8[8192]{0}', space=vmem, size = 0x2000, scoped, tag = 'input window, operand 0, single buffered']
    #allocation3 [shape = 's32[1]{0}', space=sflag, size = 0x4, scoped, tag = 'scoped memory for tpu_custom_call.1']
    #allocation4 [shape = 's32[1]{0}', space=sflag, size = 0x4, scoped, tag = 'scoped memory for tpu_custom_call.1']
    #allocation5 [shape = 'u8[512]{0}', space=vmem, size = 0x400, scoped, tag = 'input window, operand 1, single buffered']
    #allocation6 [shape = 's32[1]{0}', space=sflag, size = 0x4, scoped, tag = 'scoped memory for tpu_custom_call.1']
    #allocation7 [shape = 'u8[4096]{0}', space=vmem, size = 0x1000, scoped, tag = 'output window, operand 0, single buffered']
    %8 = vsyncpa [#allocation3], 0
    %9 = vsyncpa [#allocation6], 0
    %10 = vsyncpa [#allocation4], 0
    // Predicated region
    $region2: #{tpu_custom_call.1} parent=1 // pred_check
      _
    $region3: #{tpu_custom_call.1} parent=1 // pred_check_branch
      %12 = sbr.rel (0) target = $region5
    $region4: #{tpu_custom_call.1} parent=1 // pred_region
      %14 = vsyncadd [#allocation3], 0
      %s15 = sshll.u32 %s0, 4
      %s16 = int_to_ptr.hbm [resolvable:$true] %s15
      %s17 = sshll.u32 [#allocation2], 4
      %s18 = int_to_ptr.vmem [resolvable:$true] %s17
      %23 = dma.hbm_to_vmem [thread:$0]  %s16, 256, %s18, [#allocation3], 128, 128, 8
    $region5: #{tpu_custom_call.1} parent=1 // pred_fallthru
      _
    // Predicated region
    $region6: #{tpu_custom_call.1} parent=1 // pred_check
      _
    $region7: #{tpu_custom_call.1} parent=1 // pred_check_branch
      %25 = sbr.rel (0) target = $region9
    $region8: #{tpu_custom_call.1} parent=1 // pred_region
      %27 = vsyncadd [#allocation6], 0
      %s29 = sshll.u32 %s1, 4
      %s30 = int_to_ptr.hbm [resolvable:$true] %s29
      %s31 = sshll.u32 [#allocation5], 4
      %s32 = int_to_ptr.vmem [resolvable:$true] %s31
      %34 = dma.hbm_to_vmem [thread:$0]  %s30, 16, %s32, [#allocation6]
    $region9: #{tpu_custom_call.1} parent=1 // pred_fallthru
      _
    // Predicated region
    $region10: #{tpu_custom_call.1} parent=1 // pred_check
      _
    $region11: #{tpu_custom_call.1} parent=1 // pred_check_branch
      %36 = sbr.rel (0) target = $region13
    $region12: #{tpu_custom_call.1} parent=1 // pred_region
      _
    $region13: #{tpu_custom_call.1} parent=1 // pred_fallthru
      _
    // Predicated region
    $region14: #{tpu_custom_call.1} parent=1 // pred_check
      _
    $region15: #{tpu_custom_call.1} parent=1 // pred_check_branch
      %38 = sbr.rel (0) target = $region17
    $region16: #{tpu_custom_call.1} parent=1 // pred_region
      %40 = dma.done [#allocation3], 256
    $region17: #{tpu_custom_call.1} parent=1 // pred_fallthru
      _
    // Predicated region
    $region18: #{tpu_custom_call.1} parent=1 // pred_check
      _
    $region19: #{tpu_custom_call.1} parent=1 // pred_check_branch
      %42 = sbr.rel (0) target = $region21
    $region20: #{tpu_custom_call.1} parent=1 // pred_region
      %44 = dma.done [#allocation6], 16
    $region21: #{tpu_custom_call.1} parent=1 // pred_fallthru
      _
    %v45 = vld [vmem:[#allocation2] sm:$0xff]
    %v46 = vld [vmem:[#allocation2 + $0x8] sm:$0xff]
    %v47 = vld [vmem:[#allocation5] sm:$0x1]
    %v48 = vld [vmem:[%s2] sm:$0x1]
    %vm49 = vcmask 261120
    %v50 = vsel %vm49, %v45, 0.0
    %51 = vadd.xlane.f32.xlu0 %v50
    %v52 = vpop.xlane.xlu0 %51
    %v53 = vsel %vm49, %v46, 0.0
    %54 = vadd.xlane.f32.xlu0 %v53
    %v55 = vpop.xlane.xlu0 %54
    %v56 = vrcp.pop 32.0
    %v57 = vmul.f32 32.0, %v56
    %v58 = vsub.f32 1.0, %v57
    %v59 = vmul.f32 %v56, %v58
    %v60 = vadd.f32 %v56, %v59
    %vm61 = vweird.f32 %v56
    %v62 = vsel %vm61, %v56, %v60
    %v63 = vmul.f32 %v52, %v62
    %v64 = vmul.f32 %v55, %v62
    %v65 = vsub.f32 %v45, %v63
    %v66 = vsub.f32 %v46, %v64
    %v67 = vmul.f32 %v65, %v65
    %v68 = vmul.f32 %v66, %v66
    %v69 = vsel %vm49, %v67, 0.0
    %70 = vadd.xlane.f32.xlu0 %v69
    %v71 = vpop.xlane.xlu0 %70
    %v72 = vsel %vm49, %v68, 0.0
    %73 = vadd.xlane.f32.xlu0 %v72
    %v74 = vpop.xlane.xlu0 %73
    %v75 = vmul.f32 %v71, %v62
    %v76 = vmul.f32 %v74, %v62
    %v77 = vadd.f32 %v75, 1e-12
    %v78 = vadd.f32 %v76, 1e-12
    %v79 = vrsqrt.pop %v77
    %v80 = vmul.f32 %v79, %v77
    %v81 = vmul.f32 %v80, %v79
    %v82 = vmul.f32 0.5, %v81
    %v83 = vsub.f32 1.5, %v82
    %v84 = vmul.f32 %v79, %v83
    %vm85 = vweird.f32 %v77
    %vm86 = vweird.f32 %v79
    %vm87 = vmor %vm85, %vm86
    %v88 = vsel %vm87, %v79, %v84
    %v89 = vrsqrt.pop %v78
    %v90 = vmul.f32 %v89, %v78
    %v91 = vmul.f32 %v90, %v89
    %v92 = vmul.f32 0.5, %v91
    %v93 = vsub.f32 1.5, %v92
    %v94 = vmul.f32 %v89, %v93
    %vm95 = vweird.f32 %v78
    %vm96 = vweird.f32 %v89
    %vm97 = vmor %vm95, %vm96
    %v98 = vsel %vm97, %v89, %v94
    %v99 = vmul.f32 %v65, %v88
    %v100 = vmul.f32 %v66, %v98
    %v102 = vperm.slane %v47, 0
    %v104 = vmul.f32 %v99, %v102
    %v105 = vmul.f32 %v100, %v102
    %v107 = vperm.slane %v48, 0
    %v109 = vadd.f32 %v104, %v107
    %v110 = vadd.f32 %v105, %v107
    %v111 = vpack.c.bf16 %v109, %v109
    %v112 = vpack.c.bf16 %v110, %v110
    %vm113 = vcmask 257024
    %114 = vst.msk [vmem:[#allocation7] sm:$0xf] %vm113, %v111
    %115 = vst.msk [vmem:[#allocation7 + $0x4] sm:$0xf] %vm113, %v112
    // Predicated region
    $region22: #{tpu_custom_call.1} parent=1 // pred_check
      _
    $region23: #{tpu_custom_call.1} parent=1 // pred_check_branch
      %117 = sbr.rel (0) target = $region25
    $region24: #{tpu_custom_call.1} parent=1 // pred_region
      %119 = vsyncadd [#allocation4], 0
      %s120 = sshll.u32 [#allocation7], 4
      %s121 = int_to_ptr.vmem [resolvable:$true] %s120
      %s122 = sshll.u32 %s3, 4
      %s123 = int_to_ptr.hbm [resolvable:$true] %s122
      %128 = dma.vmem_to_hbm [thread:$0]  %s121, 128, %s123, [#allocation4], 64, 64, 4
    $region25: #{tpu_custom_call.1} parent=1 // pred_fallthru
      _
    // Predicated region
    $region26: #{tpu_custom_call.1} parent=1 // pred_check
      _
    $region27: #{tpu_custom_call.1} parent=1 // pred_check_branch
      %130 = sbr.rel (0) target = $region29
    $region28: #{tpu_custom_call.1} parent=1 // pred_region
      %132 = dma.done [#allocation4], 128
    $region29: #{tpu_custom_call.1} parent=1 // pred_fallthru
      _
    %133 = vsyncpa [#allocation3], 1
    %134 = vsyncpa [#allocation6], 1
    %135 = vsyncpa [#allocation4], 1

</llo_original>
